<compile_context>
chip_gen: v6e
topology: v6e:2x2x1
jax: 0.10.0
libtpu: 0.0.40
codegen_flags: <defaults>
</compile_context>

<pallas_src>
import jax
import jax.numpy as jnp
from jax.experimental import pallas as pl
from jax.experimental.pallas import tpu as pltpu


def _round_up(n, m):
    return ((n + m - 1) // m) * m


def _cen_qb_kernel(x_ref, w1_ref, b1_ref, wabT_ref, bab_ref, z_ref,
                   p_ref, a_sc, b_sc):
    # ItemNet: run once per item tile (only on the first person-tile step).
    @pl.when(pl.program_id(1) == 0)
    def _itemnet():
        # h^T[h, i] = sigmoid(sum_u W1[h, u] * x[i, u] + b1[h])        : (H, TI)
        # (contract the user axis of both operands -> no transpose of x anywhere)
        hT = jnp.einsum("hu,iu->hi", w1_ref[...], x_ref[...],
                        preferred_element_type=jnp.float32)
        hT = jax.nn.sigmoid(hT + b1_ref[...])
        # Fused a/b head: [Wa; Wb] @ h^T + [ba; bb]                    : (2, TI)
        abT = jnp.dot(wabT_ref[...], hT,
                      preferred_element_type=jnp.float32) + bab_ref[...]
        a_sc[...] = jax.nn.sigmoid(abT[0:1, :]) * 3.0                  # (1, TI) discrimination
        b_sc[...] = jnp.tanh(abT[1:2, :]) * 3.0                        # (1, TI) difficulty

    # p[person, item] = sigmoid(a[item] * (z[person] - b[item]))       : (TP, TI)
    p_ref[...] = jax.nn.sigmoid(a_sc[...] * (z_ref[...] - b_sc[...]))


def cen_qb_forward(x_item, z, params, *, item_tile=256, person_tile=512):
    """x_item: (num_items, num_users) f32, z: (num_persons, 1) f32.
    Returns p: (num_persons, num_items) f32 (PyTorch convention)."""
    I, U = x_item.shape
    P = z.shape[0]
    H = params["w1"].shape[1]

    # PyTorch-native weight layout so the kernel computes h^T / a^T / b^T directly.
    w1t = params["w1"].T.astype(jnp.float32)                            # (H, U) == fc1.weight
    b1c = params["b1"].reshape(H, 1).astype(jnp.float32)                # (H, 1)
    wabT = jnp.concatenate([params["wa"], params["wb"]], axis=1).T      # (2, H) fused [Wa; Wb]
    wabT = wabT.astype(jnp.float32)
    babc = jnp.concatenate([params["ba"], params["bb"]]).reshape(2, 1)  # (2, 1) fused [ba; bb]
    babc = babc.astype(jnp.float32)

    # Tile sizes: items on lanes (multiple of 128), persons on sublanes (multiple of 8).
    TI = min(item_tile, _round_up(I, 128))
    TP = min(person_tile, _round_up(P, 8))
    I_pad = _round_up(I, TI)
    P_pad = _round_up(P, TP)

    x = x_item.astype(jnp.float32)                                      # natural (I, U) layout
    if I_pad != I:
        x = jnp.pad(x, ((0, I_pad - I), (0, 0)))
    z_col = z.reshape(P, 1).astype(jnp.float32)                         # (P, 1)
    if P_pad != P:
        z_col = jnp.pad(z_col, ((0, P_pad - P), (0, 0)))

    grid = (pl.cdiv(I_pad, TI), pl.cdiv(P_pad, TP))

    p_pad = pl.pallas_call(
        _cen_qb_kernel,
        out_shape=jax.ShapeDtypeStruct((P_pad, I_pad), jnp.float32),
        grid_spec=pltpu.PrefetchScalarGridSpec(
            num_scalar_prefetch=0,
            grid=grid,
            in_specs=[
                pl.BlockSpec((TI, U), lambda i, j: (i, 0)),   # x item tile (natural layout)
                pl.BlockSpec((H, U), lambda i, j: (0, 0)),    # W1 (torch fc1.weight layout)
                pl.BlockSpec((H, 1), lambda i, j: (0, 0)),    # b1 column
                pl.BlockSpec((2, H), lambda i, j: (0, 0)),    # fused [Wa; Wb]
                pl.BlockSpec((2, 1), lambda i, j: (0, 0)),    # fused [ba; bb]
                pl.BlockSpec((TP, 1), lambda i, j: (j, 0)),   # z person tile
            ],
            out_specs=pl.BlockSpec((TP, TI), lambda i, j: (j, i)),
            scratch_shapes=[
                pltpu.VMEM((1, TI), jnp.float32),   # a (scaled), persists across person tiles
                pltpu.VMEM((1, TI), jnp.float32),   # b (scaled)
            ],
        ),
        compiler_params=pltpu.CompilerParams(
            dimension_semantics=("parallel", "arbitrary")),
    )(x, w1t, b1c, wabT, babc, z_col)

    if P_pad == P and I_pad == I:
        return p_pad
    return p_pad[:P, :I]


def _reference_forward(x_item, z, params):
    h = jax.nn.sigmoid(x_item @ params["w1"] + params["b1"])
    a = jax.nn.sigmoid(h @ params["wa"] + params["ba"]) * 3.0    # (I, 1)
    b = jnp.tanh(h @ params["wb"] + params["bb"]) * 3.0          # (I, 1)
    a = a.reshape(1, -1)
    b = b.reshape(1, -1)
    return 1.0 / (1.0 + jnp.exp(-a * (z - b)))


if __name__ == "__main__":
    num_items, num_users = 8, 32      # x_item batch of item response vectors
    num_persons = 16                  # rows of z (PersonNet CSV stand-in)
    hidden_dim = 32

    key = jax.random.PRNGKey(0)
    kx, kz, k1, k2, k3, k4, k5, k6 = jax.random.split(key, 8)

    x_item = jax.random.normal(kx, (num_items, num_users), jnp.float32)
    # PersonNet: z is a fixed person-ability tensor (CSV load replaced by deterministic init).
    z = jax.random.normal(kz, (num_persons, 1), jnp.float32)

    def uinit(k, shape, fan_in):
        bound = 1.0 / jnp.sqrt(fan_in)
        return jax.random.uniform(k, shape, jnp.float32, -bound, bound)

    params = {
        "w1": uinit(k1, (num_users, hidden_dim), num_users),      # fc1.weight.T
        "b1": uinit(k2, (hidden_dim,), num_users),
        "wa": uinit(k3, (hidden_dim, 1), hidden_dim),             # linear_a.weight.T
        "ba": uinit(k4, (1,), hidden_dim),
        "wb": uinit(k5, (hidden_dim, 1), hidden_dim),             # linear_b.weight.T
        "bb": uinit(k6, (1,), hidden_dim),
    }
    # TODO(synk): depth=3 path (fc2/fc3) and relu/leakyrelu/tanh activation variants are not
    # exercised since depth=1 / sigmoid is the module default used by CEN_QB.

    p = jax.block_until_ready(cen_qb_forward(x_item, z, params))
    p_ref = _reference_forward(x_item, z, params)

    assert p.shape == (num_persons, num_items)
    assert jnp.allclose(p, p_ref, atol=1e-5, rtol=1e-5), "mismatch vs JAX reference"
    print("KERNEL_OK")
</pallas_src>

<mosaic_0001>
module attributes {stable_mosaic.version = 11 : i64} {
  func.func @_cen_qb_kernel(%arg0: i32, %arg1: i32, %arg2: memref<128x32xf32, #tpu.memory_space<vmem>>, %arg3: memref<32x32xf32, #tpu.memory_space<vmem>>, %arg4: memref<32x1xf32, #tpu.memory_space<vmem>>, %arg5: memref<2x32xf32, #tpu.memory_space<vmem>>, %arg6: memref<2x1xf32, #tpu.memory_space<vmem>>, %arg7: memref<16x1xf32, #tpu.memory_space<vmem>>, %arg8: memref<16x128xf32, #tpu.memory_space<vmem>>, %arg9: memref<1x128xf32, #tpu.memory_space<vmem>>, %arg10: memref<1x128xf32, #tpu.memory_space<vmem>>) attributes {dimension_semantics = [#tpu.dimension_semantics<parallel>, #tpu.dimension_semantics<arbitrary>], iteration_bounds = array<i64: 1, 1>, scalar_prefetch = 0 : i64, scratch_operands = 2 : i64, tpu.core_type = #tpu.core_type<tc>, window_params = [{transform_indices = @transform_0, window_bounds = array<i64: 128, 32>}, {pipeline_mode = #tpu.pipeline_mode<synchronous>, transform_indices = @transform_1, window_bounds = array<i64: 32, 32>}, {pipeline_mode = #tpu.pipeline_mode<synchronous>, transform_indices = @transform_2, window_bounds = array<i64: 32, 1>}, {pipeline_mode = #tpu.pipeline_mode<synchronous>, transform_indices = @transform_3, window_bounds = array<i64: 2, 32>}, {pipeline_mode = #tpu.pipeline_mode<synchronous>, transform_indices = @transform_4, window_bounds = array<i64: 2, 1>}, {transform_indices = @transform_5, window_bounds = array<i64: 16, 1>}, {transform_indices = @transform_6, window_bounds = array<i64: 16, 128>}]} {
    %c0_i32 = arith.constant 0 : i32
    %0 = arith.cmpi eq, %arg1, %c0_i32 : i32
    %1 = arith.extui %0 : i1 to i32
    %c0_i32_0 = arith.constant 0 : i32
    %2 = arith.cmpi ne, %1, %c0_i32_0 : i32
    scf.if %2 {
      %c0_8 = arith.constant 0 : index
      %c0_9 = arith.constant 0 : index
      %17 = vector.load %arg3[%c0_8, %c0_9] : memref<32x32xf32, #tpu.memory_space<vmem>>, vector<32x32xf32>
      %c0_10 = arith.constant 0 : index
      %c0_11 = arith.constant 0 : index
      %18 = vector.load %arg2[%c0_10, %c0_11] : memref<128x32xf32, #tpu.memory_space<vmem>>, vector<128x32xf32>
      "tpu.trace_start"() <{level = 10 : i32, message = "hu,iu->hi"}> : () -> ()
      %cst_12 = arith.constant dense<0.000000e+00> : vector<32x128xf32>
      %19 = tpu.matmul %17, %18, %cst_12 {dimension_numbers = #tpu.dot_dimension_numbers<[1], [1], [0], [0], [0, 0, 1, 0], [], []>} : vector<32x32xf32>, vector<128x32xf32>, vector<32x128xf32> -> vector<32x128xf32>
      "tpu.trace_stop"() : () -> ()
      %c0_13 = arith.constant 0 : index
      %c0_14 = arith.constant 0 : index
      %20 = vector.load %arg4[%c0_13, %c0_14] : memref<32x1xf32, #tpu.memory_space<vmem>>, vector<32x1xf32>
      %21 = vector.broadcast %20 : vector<32x1xf32> to vector<32x128xf32>
      %22 = arith.addf %19, %21 : vector<32x128xf32>
      %23 = arith.negf %22 : vector<32x128xf32>
      %24 = math.exp %23 : vector<32x128xf32>
      %cst_15 = arith.constant 1.000000e+00 : f32
      %25 = vector.broadcast %cst_15 : f32 to vector<32x128xf32>
      %26 = arith.addf %25, %24 : vector<32x128xf32>
      %27 = arith.divf %25, %26 : vector<32x128xf32>
      %c0_16 = arith.constant 0 : index
      %c0_17 = arith.constant 0 : index
      %28 = vector.load %arg5[%c0_16, %c0_17] : memref<2x32xf32, #tpu.memory_space<vmem>>, vector<2x32xf32>
      %cst_18 = arith.constant dense<0.000000e+00> : vector<2x128xf32>
      %29 = tpu.matmul %28, %27, %cst_18 {dimension_numbers = #tpu.dot_dimension_numbers<[1], [0], [0], [1], [0, 0, 1, 1], [], []>} : vector<2x32xf32>, vector<32x128xf32>, vector<2x128xf32> -> vector<2x128xf32>
      %c0_19 = arith.constant 0 : index
      %c0_20 = arith.constant 0 : index
      %30 = vector.load %arg6[%c0_19, %c0_20] : memref<2x1xf32, #tpu.memory_space<vmem>>, vector<2x1xf32>
      %31 = vector.broadcast %30 : vector<2x1xf32> to vector<2x128xf32>
      %32 = arith.addf %29, %31 : vector<2x128xf32>
      %33 = vector.extract_strided_slice %32 {offsets = [0, 0], sizes = [1, 128], strides = [1, 1]} : vector<2x128xf32> to vector<1x128xf32>
      %34 = arith.negf %33 : vector<1x128xf32>
      %35 = math.exp %34 : vector<1x128xf32>
      %cst_21 = arith.constant 1.000000e+00 : f32
      %36 = vector.broadcast %cst_21 : f32 to vector<1x128xf32>
      %37 = arith.addf %36, %35 : vector<1x128xf32>
      %38 = arith.divf %36, %37 : vector<1x128xf32>
      %cst_22 = arith.constant 3.000000e+00 : f32
      %39 = vector.broadcast %cst_22 : f32 to vector<1x128xf32>
      %40 = arith.mulf %38, %39 : vector<1x128xf32>
      %c0_23 = arith.constant 0 : index
      %c0_24 = arith.constant 0 : index
      %41 = vector.load %arg9[%c0_23, %c0_24] : memref<1x128xf32, #tpu.memory_space<vmem>>, vector<1x128xf32>
      tpu.vector_store %arg9[%c0_23, %c0_24], %40 {strides = array<i32>} : memref<1x128xf32, #tpu.memory_space<vmem>>, vector<1x128xf32>,
      %42 = vector.extract_strided_slice %32 {offsets = [1, 0], sizes = [1, 128], strides = [1, 1]} : vector<2x128xf32> to vector<1x128xf32>
      %43 = math.tanh %42 : vector<1x128xf32>
      %cst_25 = arith.constant 3.000000e+00 : f32
      %44 = vector.broadcast %cst_25 : f32 to vector<1x128xf32>
      %45 = arith.mulf %43, %44 : vector<1x128xf32>
      %c0_26 = arith.constant 0 : index
      %c0_27 = arith.constant 0 : index
      %46 = vector.load %arg10[%c0_26, %c0_27] : memref<1x128xf32, #tpu.memory_space<vmem>>, vector<1x128xf32>
      tpu.vector_store %arg10[%c0_26, %c0_27], %45 {strides = array<i32>} : memref<1x128xf32, #tpu.memory_space<vmem>>, vector<1x128xf32>,
    } else {
    }
    %c0 = arith.constant 0 : index
    %c0_1 = arith.constant 0 : index
    %3 = vector.load %arg9[%c0, %c0_1] : memref<1x128xf32, #tpu.memory_space<vmem>>, vector<1x128xf32>
    %c0_2 = arith.constant 0 : index
    %c0_3 = arith.constant 0 : index
    %4 = vector.load %arg7[%c0_2, %c0_3] : memref<16x1xf32, #tpu.memory_space<vmem>>, vector<16x1xf32>
    %c0_4 = arith.constant 0 : index
    %c0_5 = arith.constant 0 : index
    %5 = vector.load %arg10[%c0_4, %c0_5] : memref<1x128xf32, #tpu.memory_space<vmem>>, vector<1x128xf32>
    %6 = vector.broadcast %4 : vector<16x1xf32> to vector<16x128xf32>
    %7 = vector.broadcast %5 : vector<1x128xf32> to vector<16x128xf32>
    %8 = arith.subf %6, %7 : vector<16x128xf32>
    %9 = vector.broadcast %3 : vector<1x128xf32> to vector<16x128xf32>
    %10 = arith.mulf %9, %8 : vector<16x128xf32>
    %11 = arith.negf %10 : vector<16x128xf32>
    %12 = math.exp %11 : vector<16x128xf32>
    %cst = arith.constant 1.000000e+00 : f32
    %13 = vector.broadcast %cst : f32 to vector<16x128xf32>
    %14 = arith.addf %13, %12 : vector<16x128xf32>
    %15 = arith.divf %13, %14 : vector<16x128xf32>
    %c0_6 = arith.constant 0 : index
    %c0_7 = arith.constant 0 : index
    %16 = vector.load %arg8[%c0_6, %c0_7] : memref<16x128xf32, #tpu.memory_space<vmem>>, vector<16x128xf32>
    tpu.vector_store %arg8[%c0_6, %c0_7], %15 {strides = array<i32>} : memref<16x128xf32, #tpu.memory_space<vmem>>, vector<16x128xf32>,
    return
  }
  func.func @transform_0(%arg0: i32, %arg1: i32) -> (i32, i32) {
    %c0_i32 = arith.constant 0 : i32
    %c0_i32_0 = arith.constant 0 : i32
    return %arg0, %c0_i32 : i32, i32
  }
  func.func @transform_1(%arg0: i32, %arg1: i32) -> (i32, i32) {
    %c0_i32 = arith.constant 0 : i32
    %c0_i32_0 = arith.constant 0 : i32
    %c0_i32_1 = arith.constant 0 : i32
    return %c0_i32, %c0_i32_0 : i32, i32
  }
  func.func @transform_2(%arg0: i32, %arg1: i32) -> (i32, i32) {
    %c0_i32 = arith.constant 0 : i32
    %c0_i32_0 = arith.constant 0 : i32
    %c0_i32_1 = arith.constant 0 : i32
    return %c0_i32, %c0_i32_0 : i32, i32
  }
  func.func @transform_3(%arg0: i32, %arg1: i32) -> (i32, i32) {
    %c0_i32 = arith.constant 0 : i32
    %c0_i32_0 = arith.constant 0 : i32
    %c0_i32_1 = arith.constant 0 : i32
    return %c0_i32, %c0_i32_0 : i32, i32
  }
  func.func @transform_4(%arg0: i32, %arg1: i32) -> (i32, i32) {
    %c0_i32 = arith.constant 0 : i32
    %c0_i32_0 = arith.constant 0 : i32
    %c0_i32_1 = arith.constant 0 : i32
    return %c0_i32, %c0_i32_0 : i32, i32
  }
  func.func @transform_5(%arg0: i32, %arg1: i32) -> (i32, i32) {
    %c0_i32 = arith.constant 0 : i32
    %c0_i32_0 = arith.constant 0 : i32
    return %arg1, %c0_i32 : i32, i32
  }
  func.func @transform_6(%arg0: i32, %arg1: i32) -> (i32, i32) {
    %c0_i32 = arith.constant 0 : i32
    return %arg1, %arg0 : i32, i32
  }
}

</mosaic_0001>

<llo_original>
// kernel: tpu_custom_call.1
$region0: #{tpu_custom_call.1}
  #allocation0 [shape = 'u32[]', space=smem, size = 0x4, offset = 0x4, fixed_abs, tag = 'smem constant byte address 0x4 - core index']
  #allocation1 [shape = 'u32[144,128]{1,0:T(1,128)}', space=vmem, size = 0x12000, scoped, tag = 'internal scratch']
  #allocation2 [shape = 'f32[1,128]{1,0:T(1,128)}', space=vmem, size = 0x200, scoped, tag = 'scratch operand']
  #allocation3 [shape = 'f32[1,128]{1,0:T(1,128)}', space=vmem, size = 0x200, scoped, tag = 'scratch operand']
  %s0 = inlined_call_operand.vmem [shape: f32[128,32], index: 0, kind: input, shape index: {}]
  %s1 = inlined_call_operand.vmem [shape: f32[32,32], index: 1, kind: input, shape index: {}]
  %s2 = inlined_call_operand.vmem [shape: f32[32,1], index: 2, kind: input, shape index: {}]
  %s3 = inlined_call_operand.vmem [shape: f32[2,32], index: 3, kind: input, shape index: {}]
  %s4 = inlined_call_operand.vmem [shape: f32[2,1], index: 4, kind: input, shape index: {}]
  %s5 = inlined_call_operand.vmem [shape: f32[16,1], index: 5, kind: input, shape index: {}]
  %s6 = inlined_call_operand.hbm [shape: f32[16,128], index: 6, kind: output, shape index: {}]
  %s7 = sld [smem:[#allocation0]]
  $region38: #{tpu_custom_call.1} parent=0
    _
  %s9 = ssub.s32 1, %s7
  %s10 = scalar_select 0, %s9, %s7
  $region1: #{tpu_custom_call.1} parent=0
    #allocation4 [shape = 'u8[8192]{0}', space=vmem, size = 0x2000, scoped, tag = 'output window, operand 0, single buffered']
    #allocation5 [shape = 's32[1]{0}', space=sflag, size = 0x4, scoped, tag = 'scoped memory for tpu_custom_call.1']
    %11 = vsyncpa [#allocation5], 0
    // Predicated region
    $region2: #{tpu_custom_call.1} parent=1 // pred_check
      _
    $region3: #{tpu_custom_call.1} parent=1 // pred_check_branch
      %13 = sbr.rel (0) target = $region5
    $region4: #{tpu_custom_call.1} parent=1 // pred_region
      _
    $region5: #{tpu_custom_call.1} parent=1 // pred_fallthru
      _
    // Predicated region
    $region6: #{tpu_custom_call.1} parent=1 // pred_check
      _
    $region7: #{tpu_custom_call.1} parent=1 // pred_check_branch
      %15 = sbr.rel (0) target = $region9
    $region8: #{tpu_custom_call.1} parent=1 // pred_region
      _
    $region9: #{tpu_custom_call.1} parent=1 // pred_fallthru
      _
    // Predicated region
    $region10: #{tpu_custom_call.1} parent=1 // pred_check
      _
    $region11: #{tpu_custom_call.1} parent=1 // pred_check_branch
      %17 = sbr.rel (0) target = $region13
    $region12: #{tpu_custom_call.1} parent=1 // pred_region
      _
    $region13: #{tpu_custom_call.1} parent=1 // pred_fallthru
      _
    // Predicated region
    $region14: #{tpu_custom_call.1} parent=1 // pred_check
      _
    $region15: #{tpu_custom_call.1} parent=1 // pred_check_branch
      %19 = sbr.rel (0) target = $region17
    $region16: #{tpu_custom_call.1} parent=1 // pred_region
      _
    $region17: #{tpu_custom_call.1} parent=1 // pred_fallthru
      _
    // Predicated region
    $region18: #{tpu_custom_call.1} parent=1 // pred_check
      _
    $region19: #{tpu_custom_call.1} parent=1 // pred_check_branch
      %21 = sbr.rel (0) target = $region21
    $region20: #{tpu_custom_call.1} parent=1 // pred_region
      _
    $region21: #{tpu_custom_call.1} parent=1 // pred_fallthru
      _
    // Predicated region
    $region22: #{tpu_custom_call.1} parent=1 // pred_check
      _
    $region23: #{tpu_custom_call.1} parent=1 // pred_check_branch
      %23 = sbr.rel (0) target = $region25
    $region24: #{tpu_custom_call.1} parent=1 // pred_region
      _
    $region25: #{tpu_custom_call.1} parent=1 // pred_fallthru
      _
    %p24 = scmp.eq.s32.totalorder 0, 0
    // Predicated region
    $region26: #{tpu_custom_call.1} parent=1 // pred_check
      %p25 = pneg %p24
    $region27: #{tpu_custom_call.1} parent=1 // pred_check_branch
      %27 = sbr.rel (%p25) target = $region29
    $region28: #{tpu_custom_call.1} parent=1 // pred_region
      %v28 = vld [vmem:[%s1] sm:$0xff]
      %v29 = vld [vmem:[%s1 + $0x8] sm:$0xff]
      %v30 = vld [vmem:[%s1 + $0x10] sm:$0xff]
      %v31 = vld [vmem:[%s1 + $0x18] sm:$0xff]
      %v32 = vld [vmem:[%s0] sm:$0xff]
      %v33 = vld [vmem:[%s0 + $0x8] sm:$0xff]
      %v34 = vld [vmem:[%s0 + $0x10] sm:$0xff]
      %v35 = vld [vmem:[%s0 + $0x18] sm:$0xff]
      %v36 = vld [vmem:[%s0 + $0x20] sm:$0xff]
      %v37 = vld [vmem:[%s0 + $0x28] sm:$0xff]
      %v38 = vld [vmem:[%s0 + $0x30] sm:$0xff]
      %v39 = vld [vmem:[%s0 + $0x38] sm:$0xff]
      %v40 = vld [vmem:[%s0 + $0x40] sm:$0xff]
      %v41 = vld [vmem:[%s0 + $0x48] sm:$0xff]
      %v42 = vld [vmem:[%s0 + $0x50] sm:$0xff]
      %v43 = vld [vmem:[%s0 + $0x58] sm:$0xff]
      %v44 = vld [vmem:[%s0 + $0x60] sm:$0xff]
      %v45 = vld [vmem:[%s0 + $0x68] sm:$0xff]
      %v46 = vld [vmem:[%s0 + $0x70] sm:$0xff]
      %v47 = vld [vmem:[%s0 + $0x78] sm:$0xff]
      %v48 = vld [vmem:[%s2] sm:$0xff]
      %v49 = vld [vmem:[%s2 + $0x8] sm:$0xff]
      %v50 = vld [vmem:[%s2 + $0x10] sm:$0xff]
      %v51 = vld [vmem:[%s2 + $0x18] sm:$0xff]
      %53 = vset.pattern.permute.xlu0 0
      %54 = vperm.xlu0 %53, %v48
      %v55 = vpop.permute.xlu0 %54
      %58 = vset.pattern.permute.xlu0 0
      %59 = vperm.xlu0 %58, %v49
      %v60 = vpop.permute.xlu0 %59
      %63 = vset.pattern.permute.xlu0 0
      %64 = vperm.xlu0 %63, %v50
      %v65 = vpop.permute.xlu0 %64
      %68 = vset.pattern.permute.xlu0 0
      %69 = vperm.xlu0 %68, %v51
      %v70 = vpop.permute.xlu0 %69
      %vm72 = vcmask 261120
      %v74 = vsel %vm72, %v28, 0
      %v77 = vsel %vm72, %v29, 0
      %v80 = vsel %vm72, %v30, 0
      %v83 = vsel %vm72, %v31, 0
      %v86 = vsel %vm72, %v32, 0
      %v89 = vsel %vm72, %v33, 0
      %v92 = vsel %vm72, %v34, 0
      %v95 = vsel %vm72, %v35, 0
      %v98 = vsel %vm72, %v36, 0
      %v101 = vsel %vm72, %v37, 0
      %v104 = vsel %vm72, %v38, 0
      %v107 = vsel %vm72, %v39, 0
      %v110 = vsel %vm72, %v40, 0
      %v113 = vsel %vm72, %v41, 0
      %v116 = vsel %vm72, %v42, 0
      %v119 = vsel %vm72, %v43, 0
      %v122 = vsel %vm72, %v44, 0
      %v125 = vsel %vm72, %v45, 0
      %v128 = vsel %vm72, %v46, 0
      %v131 = vsel %vm72, %v47, 0
      %133 = vmatprep.subr.mxu0 0.0
      %134 = vmatpush1.xpose.msra.mxu0 %v131
      %135 = vmatprep.subr.mxu0 0.0
      %136 = vmatpush1.xpose.msra.mxu0 %v128
      %137 = vmatprep.subr.mxu0 0.0
      %138 = vmatpush1.xpose.msra.mxu0 %v125
      %139 = vmatprep.subr.mxu0 0.0
      %140 = vmatpush1.xpose.msra.mxu0 %v122
      %141 = vmatprep.subr.mxu0 0.0
      %142 = vmatpush1.xpose.msra.mxu0 %v119
      %143 = vmatprep.subr.mxu0 0.0
      %144 = vmatpush1.xpose.msra.mxu0 %v116
      %145 = vmatprep.subr.mxu0 0.0
      %146 = vmatpush1.xpose.msra.mxu0 %v113
      %147 = vmatprep.subr.mxu0 0.0
      %148 = vmatpush1.xpose.msra.mxu0 %v110
      %149 = vmatprep.subr.mxu0 0.0
      %150 = vmatpush1.xpose.msra.mxu0 %v107
      %151 = vmatprep.subr.mxu0 0.0
      %152 = vmatpush1.xpose.msra.mxu0 %v104
      %153 = vmatprep.subr.mxu0 0.0
      %154 = vmatpush1.xpose.msra.mxu0 %v101
      %155 = vmatprep.subr.mxu0 0.0
      %156 = vmatpush1.xpose.msra.mxu0 %v98
      %157 = vmatprep.subr.mxu0 0.0
      %158 = vmatpush1.xpose.msra.mxu0 %v95
      %159 = vmatprep.subr.mxu0 0.0
      %160 = vmatpush1.xpose.msra.mxu0 %v92
      %161 = vmatprep.subr.mxu0 0.0
      %162 = vmatpush1.xpose.msra.mxu0 %v89
      %163 = vmatprep.subr.mxu0 0.0
      %164 = vmatpush1.xpose.msra.mxu0 %v86
      %165 = vmatprep.subr.mxu0 0.0
      %166 = vmatpush2.xpose.msra.mxu0 0.0
      %167 = vmatprep.subr.mxu0 0.0
      %168 = vmatpush2.xpose.msra.mxu0 0.0
      %169 = vmatprep.subr.mxu0 0.0
      %170 = vmatpush2.xpose.msra.mxu0 0.0
      %171 = vmatprep.subr.mxu0 0.0
      %172 = vmatpush2.xpose.msra.mxu0 0.0
      %173 = vmatprep.subr.mxu0 0.0
      %174 = vmatpush2.xpose.msra.mxu0 0.0
      %175 = vmatprep.subr.mxu0 0.0
      %176 = vmatpush2.xpose.msra.mxu0 0.0
      %177 = vmatprep.subr.mxu0 0.0
      %178 = vmatpush2.xpose.msra.mxu0 0.0
      %179 = vmatprep.subr.mxu0 0.0
      %180 = vmatpush2.xpose.msra.mxu0 0.0
      %181 = vmatprep.subr.mxu0 0.0
      %182 = vmatpush2.xpose.msra.mxu0 0.0
      %183 = vmatprep.subr.mxu0 0.0
      %184 = vmatpush2.xpose.msra.mxu0 0.0
      %185 = vmatprep.subr.mxu0 0.0
      %186 = vmatpush2.xpose.msra.mxu0 0.0
      %187 = vmatprep.subr.mxu0 0.0
      %188 = vmatpush2.xpose.msra.mxu0 0.0
      %189 = vmatprep.subr.mxu0 0.0
      %190 = vmatpush2.xpose.msra.mxu0 0.0
      %191 = vmatprep.subr.mxu0 0.0
      %192 = vmatpush2.xpose.msra.mxu0 0.0
      %193 = vmatprep.subr.mxu0 0.0
      %194 = vmatpush2.xpose.msra.mxu0 0.0
      %195 = vmatprep.subr.mxu0 0.0
      %196 = vmatpush2.xpose.msra.mxu0 0.0
      %197 = vmatprep.mubr.f32.mxu0 0.0
      %198 = vmatmul.mubr.f32.gmra.mxu0 %v74
      %v199 = vpop.f32.mrf.mxu0
      %v200 = vadd.f32 %v55, %v199
      %v201 = vpop.f32.mrf.mxu0
      %202 = vmatprep.mubr.f32.mxu0 0.0
      %203 = vmatmul.mubr.f32.gmra.mxu0 %v77
      %v204 = vpop.f32.mrf.mxu0
      %v205 = vadd.f32 %v60, %v204
      %v206 = vpop.f32.mrf.mxu0
      %207 = vmatprep.mubr.f32.mxu0 0.0
      %208 = vmatmul.mubr.f32.gmra.mxu0 %v80
      %v209 = vpop.f32.mrf.mxu0
      %v210 = vadd.f32 %v65, %v209
      %v211 = vpop.f32.mrf.mxu0
      %212 = vmatprep.mubr.f32.mxu0 0.0
      %213 = vmatmul.mubr.f32.gmra.mxu0 %v83
      %v214 = vpop.f32.mrf.mxu0
      %v215 = vadd.f32 %v70, %v214
      %v216 = vpop.f32.mrf.mxu0
      %217 = vdwg.mxu0
      %v218 = vxor.u32 %v200, 2147483648
      %v219 = vxor.u32 %v205, 2147483648
      %v220 = vxor.u32 %v210, 2147483648
      %v221 = vxor.u32 %v215, 2147483648
      %v222 = vmul.f32 %v218, 1.442695
      %v223 = vpow.pop %v222
      %v224 = vmul.f32 %v219, 1.442695
      %v225 = vpow.pop %v224
      %v226 = vmul.f32 %v220, 1.442695
      %v227 = vpow.pop %v226
      %v228 = vmul.f32 %v221, 1.442695
      %v229 = vpow.pop %v228
      %v230 = vadd.f32 %v223, 1.0
      %v231 = vadd.f32 %v225, 1.0
      %v232 = vadd.f32 %v227, 1.0
      %v233 = vadd.f32 %v229, 1.0
      %v234 = vrcp.pop %v230
      %v235 = vmul.f32 1.0, %v234
      %v236 = vrcp.pop %v231
      %v237 = vmul.f32 1.0, %v236
      %v238 = vrcp.pop %v232
      %v239 = vmul.f32 1.0, %v238
      %v240 = vrcp.pop %v233
      %v241 = vmul.f32 1.0, %v240
      %v242 = vld [vmem:[%s3] sm:$0x3]
      %v243 = vld [vmem:[%s4] sm:$0x3]
      %245 = vset.pattern.permute.xlu0 0
      %246 = vperm.xlu0 %245, %v243
      %v247 = vpop.permute.xlu0 %246
      %v250 = vsel %vm72, %v242, 0
      %252 = vmatprep.subr.mxu0 0.0
      %253 = vmatpush1.msra.mxu0 0.0
      %254 = vmatprep.subr.mxu0 0.0
      %255 = vmatpush1.msra.mxu0 0.0
      %256 = vmatprep.subr.mxu0 0.0
      %257 = vmatpush1.msra.mxu0 0.0
      %258 = vmatprep.subr.mxu0 0.0
      %259 = vmatpush1.msra.mxu0 0.0
      %260 = vmatprep.subr.mxu0 0.0
      %261 = vmatpush1.msra.mxu0 0.0
      %262 = vmatprep.subr.mxu0 0.0
      %263 = vmatpush1.msra.mxu0 0.0
      %264 = vmatprep.subr.mxu0 0.0
      %265 = vmatpush1.msra.mxu0 0.0
      %266 = vmatprep.subr.mxu0 0.0
      %267 = vmatpush1.msra.mxu0 0.0
      %268 = vmatprep.subr.mxu0 0.0
      %269 = vmatpush1.msra.mxu0 0.0
      %270 = vmatprep.subr.mxu0 0.0
      %271 = vmatpush1.msra.mxu0 0.0
      %272 = vmatprep.subr.mxu0 0.0
      %273 = vmatpush1.msra.mxu0 0.0
      %274 = vmatprep.subr.mxu0 0.0
      %275 = vmatpush1.msra.mxu0 0.0
      %276 = vmatprep.subr.mxu0 0.0
      %277 = vmatpush1.msra.mxu0 %v241
      %278 = vmatprep.subr.mxu0 0.0
      %279 = vmatpush1.msra.mxu0 %v239
      %280 = vmatprep.subr.mxu0 0.0
      %281 = vmatpush1.msra.mxu0 %v237
      %282 = vmatprep.subr.mxu0 0.0
      %283 = vmatpush1.msra.mxu0 %v235
      %284 = vmatprep.subr.mxu0 0.0
      %285 = vmatpush2.msra.mxu0 0.0
      %286 = vmatprep.subr.mxu0 0.0
      %287 = vmatpush2.msra.mxu0 0.0
      %288 = vmatprep.subr.mxu0 0.0
      %289 = vmatpush2.msra.mxu0 0.0
      %290 = vmatprep.subr.mxu0 0.0
      %291 = vmatpush2.msra.mxu0 0.0
      %292 = vmatprep.subr.mxu0 0.0
      %293 = vmatpush2.msra.mxu0 0.0
      %294 = vmatprep.subr.mxu0 0.0
      %295 = vmatpush2.msra.mxu0 0.0
      %296 = vmatprep.subr.mxu0 0.0
      %297 = vmatpush2.msra.mxu0 0.0
      %298 = vmatprep.subr.mxu0 0.0
      %299 = vmatpush2.msra.mxu0 0.0
      %300 = vmatprep.subr.mxu0 0.0
      %301 = vmatpush2.msra.mxu0 0.0
      %302 = vmatprep.subr.mxu0 0.0
      %303 = vmatpush2.msra.mxu0 0.0
      %304 = vmatprep.subr.mxu0 0.0
      %305 = vmatpush2.msra.mxu0 0.0
      %306 = vmatprep.subr.mxu0 0.0
      %307 = vmatpush2.msra.mxu0 0.0
      %308 = vmatprep.subr.mxu0 0.0
      %309 = vmatpush2.msra.mxu0 0.0
      %310 = vmatprep.subr.mxu0 0.0
      %311 = vmatpush2.msra.mxu0 0.0
      %312 = vmatprep.subr.mxu0 0.0
      %313 = vmatpush2.msra.mxu0 0.0
      %314 = vmatprep.subr.mxu0 0.0
      %315 = vmatpush2.msra.mxu0 0.0
      %316 = vmatprep.mubr.f32.mxu0 0.0
      %317 = vmatmul.mubr.f32.gmra.mxu0 %v250
      %v318 = vpop.f32.mrf.mxu0
      %v319 = vadd.f32 %v247, %v318
      %v320 = vpop.f32.mrf.mxu0
      %321 = vdwg.mxu0
      %v322 = vxor.u32 %v319, 2147483648
      %v323 = vmul.f32 %v322, 1.442695
      %v324 = vpow.pop %v323
      %v325 = vadd.f32 %v324, 1.0
      %v326 = vrcp.pop %v325
      %v327 = vmul.f32 1.0, %v326
      %v328 = vmul.f32 %v327, 3.0
      %329 = vst [vmem:[#allocation2] sm:$0x1] %v328
      %v330 = vtanh.pop %v319
      %v331 = vmul.f32 %v330, 3.0
      %332 = vst [vmem:[#allocation3 - $0x1] sm:$0x2] %v331
    $region29: #{tpu_custom_call.1} parent=1 // pred_fallthru
      _
    %v333 = vld [vmem:[#allocation2] sm:$0x1]
    %v334 = vld [vmem:[%s5] sm:$0xff]
    %v335 = vld [vmem:[%s5 + $0x8] sm:$0xff]
    %v336 = vld [vmem:[#allocation3] sm:$0x1]
    %338 = vset.pattern.permute.xlu0 0
    %339 = vperm.xlu0 %338, %v334
    %v340 = vpop.permute.xlu0 %339
    %343 = vset.pattern.permute.xlu0 0
    %344 = vperm.xlu0 %343, %v335
    %v345 = vpop.permute.xlu0 %344
    %v348 = vlaneseq
    %v349 = vshrl.u32 %v348, 7
    %v350 = vsub.s32 0, %v349
    %v351 = vrot.slane %v336, %v350
    %v353 = vsub.f32 %v340, %v351
    %v354 = vsub.f32 %v345, %v351
    %v356 = vlaneseq
    %v357 = vshrl.u32 %v356, 7
    %v358 = vsub.s32 0, %v357
    %v359 = vrot.slane %v333, %v358
    %v361 = vmul.f32 %v359, %v353
    %v362 = vmul.f32 %v359, %v354
    %v363 = vxor.u32 %v361, 2147483648
    %v364 = vxor.u32 %v362, 2147483648
    %v365 = vmul.f32 %v363, 1.442695
    %v366 = vpow.pop %v365
    %v367 = vmul.f32 %v364, 1.442695
    %v368 = vpow.pop %v367
    %v369 = vadd.f32 %v366, 1.0
    %v370 = vadd.f32 %v368, 1.0
    %v371 = vrcp.pop %v369
    %v372 = vmul.f32 1.0, %v371
    %v373 = vrcp.pop %v370
    %v374 = vmul.f32 1.0, %v373
    %375 = vst [vmem:[#allocation4] sm:$0xff] %v372
    %376 = vst [vmem:[#allocation4 + $0x8] sm:$0xff] %v374
    // Predicated region
    $region30: #{tpu_custom_call.1} parent=1 // pred_check
      _
    $region31: #{tpu_custom_call.1} parent=1 // pred_check_branch
      %378 = sbr.rel (0) target = $region33
    $region32: #{tpu_custom_call.1} parent=1 // pred_region
      %s380 = ssub.s32 256, 256
      %381 = vsyncadd [#allocation5], %s380
      %s382 = sshll.u32 [#allocation4], 4
      %s383 = int_to_ptr.vmem [resolvable:$true] %s382
      %388 = dma.vmem_to_hbm [thread:$0]  %s383, 256, %s6, [#allocation5], 128, 128, 8
    $region33: #{tpu_custom_call.1} parent=1 // pred_fallthru
      _
    // Predicated region
    $region34: #{tpu_custom_call.1} parent=1 // pred_check
      _
    $region35: #{tpu_custom_call.1} parent=1 // pred_check_branch
      %390 = sbr.rel (0) target = $region37
    $region36: #{tpu_custom_call.1} parent=1 // pred_region
      %391 = dma.done [#allocation5], 256
    $region37: #{tpu_custom_call.1} parent=1 // pred_fallthru
      _
    %392 = vsyncpa [#allocation5], 1

</llo_original>
